<compile_context>
chip_gen: v7x
topology: tpu7x:2x2x1
jax: 0.10.0
libtpu: 0.0.40
codegen_flags: <defaults>
</compile_context>

<pallas_src>
import functools

import jax
import jax.numpy as jnp
from jax.experimental import pallas as pl
from jax.experimental.pallas import tpu as pltpu


# ----------------------------------------------------------------------------
# Kernels
# ----------------------------------------------------------------------------
def _gcn_layer1_kernel(a_ref, m_ref, w1_ref, b1_ref, mask_ref, h_ref, acc_ref,
                       *, apply_w_after):
    """acc += A_w[i,k] @ M[k];  at k==last: (optionally @W1) + b1, relu, dropout."""
    k = pl.program_id(1)

    @pl.when(k == 0)
    def _():
        acc_ref[...] = jnp.zeros_like(acc_ref)

    acc_ref[...] += jnp.dot(a_ref[...], m_ref[...],
                            preferred_element_type=jnp.float32)

    @pl.when(k == pl.num_programs(1) - 1)
    def _():
        acc = acc_ref[...]
        if apply_w_after:
            # streamed matrix was X: finish (A @ X) @ W1
            z = jnp.dot(acc.astype(jnp.bfloat16), w1_ref[...],
                        preferred_element_type=jnp.float32)
        else:
            # streamed matrix was X @ W1: accumulator already holds the conv
            z = acc
        z = z + b1_ref[...]
        h = jnp.maximum(z, 0.0) * mask_ref[...]   # relu + pre-scaled dropout mask
        h_ref[...] = h.astype(h_ref.dtype)


def _gcn_layer2_kernel(a_ref, h_ref, w2_ref, b2_ref, z_ref, acc_ref):
    """acc += A_u[i,k] @ H[k];  at k==last: @W2 + b2, log_softmax over classes."""
    k = pl.program_id(1)

    @pl.when(k == 0)
    def _():
        acc_ref[...] = jnp.zeros_like(acc_ref)

    acc_ref[...] += jnp.dot(a_ref[...], h_ref[...],
                            preferred_element_type=jnp.float32)

    @pl.when(k == pl.num_programs(1) - 1)
    def _():
        z = jnp.dot(acc_ref[...].astype(jnp.bfloat16), w2_ref[...],
                    preferred_element_type=jnp.float32) + b2_ref[...]
        m = jnp.max(z, axis=1, keepdims=True)
        lse = jnp.log(jnp.sum(jnp.exp(z - m), axis=1, keepdims=True)) + m
        z_ref[...] = z - lse


# ----------------------------------------------------------------------------
# Plain-JAX glue
# ----------------------------------------------------------------------------
def _round_up(x, m):
    return (x + m - 1) // m * m


def _pad2d(x, rows, cols, value=0.0):
    return jnp.pad(x, ((0, rows - x.shape[0]), (0, cols - x.shape[1])),
                   constant_values=value)


def gcn_norm(adj):
    """Dense GCN normalization  A_hat = D^-1/2 (A + I) D^-1/2."""
    n = adj.shape[0]
    adj = adj + jnp.eye(n, dtype=adj.dtype)
    deg = jnp.sum(adj, axis=1)
    dinv = jnp.where(deg > 0, 1.0 / jnp.sqrt(deg), 0.0)
    return dinv[:, None] * adj * dinv[None, :]


def gcn_forward(X, A, W_edge, params, *, dropout=0.5, dropout_training=True,
                dropout_mask=None, rng_key=None):
    """X: (N,F0) features, A: (N,N) 0/1 adjacency, W_edge: (N,N) edge weights."""
    w1, b1, w2, b2 = params
    b1 = jnp.reshape(b1, (1, -1)).astype(jnp.float32)
    b2 = jnp.reshape(b2, (1, -1)).astype(jnp.float32)

    N, F0 = X.shape
    Hd = w1.shape[1]
    C = w2.shape[1]

    # Tile sizes / padded sizes: rows to a multiple of the row tile, all
    # channel dims lane-dense (multiple of 128).
    bm = 256
    Np = _round_up(N, bm)
    bk = 512 if Np % 512 == 0 else 256
    nm, nk = Np // bm, Np // bk

    F0p = _round_up(F0, 128)
    Hp = _round_up(Hd, 128)
    Cp = _round_up(C, 128)

    # Dense gcn-normalized adjacencies (bf16 stream halves HBM traffic).
    A_w = _pad2d(gcn_norm(A * W_edge), Np, Np).astype(jnp.bfloat16)  # weighted
    A_u = _pad2d(gcn_norm(A), Np, Np).astype(jnp.bfloat16)           # unweighted

    w1_p = _pad2d(w1, F0p, Hp).astype(jnp.bfloat16)
    b1_p = _pad2d(b1, 1, Hp)
    w2_p = _pad2d(w2, Hp, Cp).astype(jnp.bfloat16)
    b2_p = _pad2d(b2, 1, Cp, value=-1e30)   # padded classes -> ~ -inf logits

    # Dropout keep-mask, pre-scaled by 1/keep_prob (generated host-side).
    if dropout_training and dropout > 0.0:
        keep_prob = 1.0 - dropout
        if dropout_mask is None:
            if keep_prob <= 0.0:
                dropout_mask = jnp.zeros((N, Hd), jnp.float32)
            else:
                if rng_key is None:
                    rng_key = jax.random.PRNGKey(0)
                keep = jax.random.bernoulli(rng_key, keep_prob, (N, Hd))
                dropout_mask = keep.astype(jnp.float32) / keep_prob
    else:
        dropout_mask = jnp.ones((N, Hd), jnp.float32)
    # 0 / (1/keep_prob) values are exactly representable in bf16 for p=0.5.
    mask_p = _pad2d(dropout_mask, Np, Hp).astype(jnp.bfloat16)

    # Layer-1 association switch: contract the smaller of (F0, hidden) on N^2.
    apply_w_after = F0 <= Hd
    if apply_w_after:
        m1 = _pad2d(X, Np, F0p).astype(jnp.bfloat16)          # stream X, (A@X)@W1
        Dm = F0p
    else:
        m1 = _pad2d(X @ w1, Np, Hp).astype(jnp.bfloat16)      # stream X@W1
        Dm = Hp

    cparams = pltpu.CompilerParams(
        dimension_semantics=("parallel", "arbitrary"))

    # ---- layer 1: H = dropout(relu(A_w @ X @ W1 + b1)) ----
    l1_cost = pl.CostEstimate(
        flops=2 * Np * Np * Dm + (2 * Np * F0p * Hp if apply_w_after else 0),
        transcendentals=0,
        bytes_accessed=Np * Np * 2 + nm * Np * Dm * 2 + Np * Hp * (2 + 2))
    h_pad = pl.pallas_call(
        functools.partial(_gcn_layer1_kernel, apply_w_after=apply_w_after),
        out_shape=jax.ShapeDtypeStruct((Np, Hp), jnp.bfloat16),
        grid=(nm, nk),
        in_specs=[
            pl.BlockSpec((bm, bk), lambda i, k: (i, k)),   # A_w tile (streamed)
            pl.BlockSpec((bk, Dm), lambda i, k: (k, 0)),   # X (or X@W1) tile
            pl.BlockSpec((F0p, Hp), lambda i, k: (0, 0)),  # W1 (resident)
            pl.BlockSpec((1, Hp), lambda i, k: (0, 0)),    # b1 (resident)
            pl.BlockSpec((bm, Hp), lambda i, k: (i, 0)),   # dropout mask row tile
        ],
        out_specs=pl.BlockSpec((bm, Hp), lambda i, k: (i, 0)),
        scratch_shapes=[pltpu.VMEM((bm, Dm), jnp.float32)],
        compiler_params=cparams,
        cost_estimate=l1_cost,
    )(A_w, m1, w1_p, b1_p, mask_p)

    # ---- layer 2: out = log_softmax(A_u @ H @ W2 + b2) ----
    l2_cost = pl.CostEstimate(
        flops=2 * Np * Np * Hp + 2 * Np * Hp * Cp,
        transcendentals=2 * Np * Cp,
        bytes_accessed=Np * Np * 2 + nm * Np * Hp * 2 + Np * Cp * 4)
    z_pad = pl.pallas_call(
        _gcn_layer2_kernel,
        out_shape=jax.ShapeDtypeStruct((Np, Cp), jnp.float32),
        grid=(nm, nk),
        in_specs=[
            pl.BlockSpec((bm, bk), lambda i, k: (i, k)),   # A_u tile (streamed)
            pl.BlockSpec((bk, Hp), lambda i, k: (k, 0)),   # H tile
            pl.BlockSpec((Hp, Cp), lambda i, k: (0, 0)),   # W2 (resident)
            pl.BlockSpec((1, Cp), lambda i, k: (0, 0)),    # b2 (resident)
        ],
        out_specs=pl.BlockSpec((bm, Cp), lambda i, k: (i, 0)),
        scratch_shapes=[pltpu.VMEM((bm, Hp), jnp.float32)],
        compiler_params=cparams,
        cost_estimate=l2_cost,
    )(A_u, h_pad, w2_p, b2_p)

    return z_pad[:N, :C]


# ----------------------------------------------------------------------------
# Deterministic parameter construction
# ----------------------------------------------------------------------------
def init_params(key, input_dim, hidden_dim, output_dim):
    k1, k2 = jax.random.split(key)
    w1 = jax.random.normal(k1, (input_dim, hidden_dim[0]), jnp.float32) * 0.1
    b1 = jnp.zeros((1, hidden_dim[0]), jnp.float32)
    w2 = jax.random.normal(k2, (hidden_dim[-1], output_dim), jnp.float32) * 0.1
    b2 = jnp.zeros((1, output_dim), jnp.float32)
    return w1, b1, w2, b2


if __name__ == "__main__":
    # small shapes: N=64 nodes, input_dim=16, hidden=[32], output_dim=8
    N, F0, Hd, C = 64, 16, 32, 8

    key = jax.random.PRNGKey(0)
    kx, ka, kw, kp, kd = jax.random.split(key, 5)

    X = jax.random.normal(kx, (N, F0), jnp.float32)
    # random symmetric 0/1 adjacency (no self loops; gcn_norm adds them)
    A_rand = (jax.random.uniform(ka, (N, N)) < 0.1).astype(jnp.float32)
    A = jnp.maximum(A_rand, A_rand.T) * (1.0 - jnp.eye(N, dtype=jnp.float32))
    # positive edge weights
    W_edge = jax.random.uniform(kw, (N, N), jnp.float32, minval=0.5, maxval=1.5)

    params = init_params(kp, F0, [Hd], C)

    # explicit dropout mask (p=0.5, training=True), pre-scaled by 1/keep_prob
    keep_prob = 0.5
    keep = jax.random.bernoulli(kd, keep_prob, (N, Hd))
    drop_mask = keep.astype(jnp.float32) / keep_prob

    out = gcn_forward(X, A, W_edge, params, dropout=0.5, dropout_training=True,
                      dropout_mask=drop_mask)
    out = jax.block_until_ready(out)

    assert out.shape == (N, C) and out.dtype == jnp.float32
    # rows of log_softmax must exp-sum to 1
    assert bool(jnp.all(jnp.abs(jnp.sum(jnp.exp(out), axis=1) - 1.0) < 1e-3))

    # pure-JAX reference with matching bf16 operand casts / f32 accumulation
    w1, b1, w2, b2 = params
    Aw = gcn_norm(A * W_edge).astype(jnp.bfloat16).astype(jnp.float32)
    Au = gcn_norm(A).astype(jnp.bfloat16).astype(jnp.float32)
    Xf = X.astype(jnp.bfloat16).astype(jnp.float32)
    w1f = w1.astype(jnp.bfloat16).astype(jnp.float32)
    w2f = w2.astype(jnp.bfloat16).astype(jnp.float32)
    ax = (Aw @ Xf).astype(jnp.bfloat16).astype(jnp.float32)
    h = jnp.maximum(ax @ w1f + b1, 0.0) * drop_mask
    h = h.astype(jnp.bfloat16).astype(jnp.float32)
    ah = (Au @ h).astype(jnp.bfloat16).astype(jnp.float32)
    z = ah @ w2f + b2
    ref = z - jax.scipy.special.logsumexp(z, axis=1, keepdims=True)
    assert bool(jnp.max(jnp.abs(out - ref)) < 5e-2), "mismatch vs reference"

    print("KERNEL_OK")
</pallas_src>

<mosaic_0001>
module attributes {stable_mosaic.version = 11 : i64} {
  func.func @_gcn_layer1_kernel(%arg0: i32, %arg1: i32, %arg2: memref<256x256xbf16, #tpu.memory_space<vmem>>, %arg3: memref<256x128xbf16, #tpu.memory_space<vmem>>, %arg4: memref<128x128xbf16, #tpu.memory_space<vmem>>, %arg5: memref<1x128xf32, #tpu.memory_space<vmem>>, %arg6: memref<256x128xbf16, #tpu.memory_space<vmem>>, %arg7: memref<256x128xbf16, #tpu.memory_space<vmem>>, %arg8: memref<256x128xf32, #tpu.memory_space<vmem>>) attributes {dimension_semantics = [#tpu.dimension_semantics<parallel>, #tpu.dimension_semantics<arbitrary>], iteration_bounds = array<i64: 1, 1>, scalar_prefetch = 0 : i64, scratch_operands = 1 : i64, tpu.core_type = #tpu.core_type<tc>, window_params = [{transform_indices = @transform_0, window_bounds = array<i64: 256, 256>}, {transform_indices = @transform_1, window_bounds = array<i64: 256, 128>}, {pipeline_mode = #tpu.pipeline_mode<synchronous>, transform_indices = @transform_2, window_bounds = array<i64: 128, 128>}, {pipeline_mode = #tpu.pipeline_mode<synchronous>, transform_indices = @transform_3, window_bounds = array<i64: 1, 128>}, {transform_indices = @transform_4, window_bounds = array<i64: 256, 128>}, {transform_indices = @transform_5, window_bounds = array<i64: 256, 128>}]} {
    %c0_i32 = arith.constant 0 : i32
    %0 = arith.cmpi eq, %arg1, %c0_i32 : i32
    %1 = arith.extui %0 : i1 to i32
    %c0_i32_0 = arith.constant 0 : i32
    %2 = arith.cmpi ne, %1, %c0_i32_0 : i32
    scf.if %2 {
      %cst_10 = arith.constant 0.000000e+00 : f32
      %12 = vector.broadcast %cst_10 : f32 to vector<256x128xf32>
      %c0_11 = arith.constant 0 : index
      %c0_12 = arith.constant 0 : index
      %13 = vector.load %arg8[%c0_11, %c0_12] : memref<256x128xf32, #tpu.memory_space<vmem>>, vector<256x128xf32>
      tpu.vector_store %arg8[%c0_11, %c0_12], %12 {strides = array<i32>} : memref<256x128xf32, #tpu.memory_space<vmem>>, vector<256x128xf32>,
    } else {
    }
    %c0 = arith.constant 0 : index
    %c0_1 = arith.constant 0 : index
    %3 = vector.load %arg8[%c0, %c0_1] : memref<256x128xf32, #tpu.memory_space<vmem>>, vector<256x128xf32>
    %c0_2 = arith.constant 0 : index
    %c0_3 = arith.constant 0 : index
    %4 = vector.load %arg2[%c0_2, %c0_3] : memref<256x256xbf16, #tpu.memory_space<vmem>>, vector<256x256xbf16>
    %c0_4 = arith.constant 0 : index
    %c0_5 = arith.constant 0 : index
    %5 = vector.load %arg3[%c0_4, %c0_5] : memref<256x128xbf16, #tpu.memory_space<vmem>>, vector<256x128xbf16>
    %cst = arith.constant dense<0.000000e+00> : vector<256x128xf32>
    %6 = tpu.matmul %4, %5, %cst {dimension_numbers = #tpu.dot_dimension_numbers<[1], [0], [0], [1], [0, 0, 1, 1], [], []>} : vector<256x256xbf16>, vector<256x128xbf16>, vector<256x128xf32> -> vector<256x128xf32>
    %7 = arith.addf %3, %6 : vector<256x128xf32>
    %c0_6 = arith.constant 0 : index
    %c0_7 = arith.constant 0 : index
    %8 = vector.load %arg8[%c0_6, %c0_7] : memref<256x128xf32, #tpu.memory_space<vmem>>, vector<256x128xf32>
    tpu.vector_store %arg8[%c0_6, %c0_7], %7 {strides = array<i32>} : memref<256x128xf32, #tpu.memory_space<vmem>>, vector<256x128xf32>,
    %c0_i32_8 = arith.constant 0 : i32
    %9 = arith.cmpi eq, %arg1, %c0_i32_8 : i32
    %10 = arith.extui %9 : i1 to i32
    %c0_i32_9 = arith.constant 0 : i32
    %11 = arith.cmpi ne, %10, %c0_i32_9 : i32
    scf.if %11 {
      %c0_10 = arith.constant 0 : index
      %c0_11 = arith.constant 0 : index
      %12 = vector.load %arg8[%c0_10, %c0_11] : memref<256x128xf32, #tpu.memory_space<vmem>>, vector<256x128xf32>
      %13 = arith.truncf %12 : vector<256x128xf32> to vector<256x128xbf16>
      %c0_12 = arith.constant 0 : index
      %c0_13 = arith.constant 0 : index
      %14 = vector.load %arg4[%c0_12, %c0_13] : memref<128x128xbf16, #tpu.memory_space<vmem>>, vector<128x128xbf16>
      %cst_14 = arith.constant dense<0.000000e+00> : vector<256x128xf32>
      %15 = tpu.matmul %13, %14, %cst_14 {dimension_numbers = #tpu.dot_dimension_numbers<[1], [0], [0], [1], [0, 0, 1, 1], [], []>} : vector<256x128xbf16>, vector<128x128xbf16>, vector<256x128xf32> -> vector<256x128xf32>
      %c0_15 = arith.constant 0 : index
      %c0_16 = arith.constant 0 : index
      %16 = vector.load %arg5[%c0_15, %c0_16] : memref<1x128xf32, #tpu.memory_space<vmem>>, vector<1x128xf32>
      %17 = vector.broadcast %16 : vector<1x128xf32> to vector<256x128xf32>
      %18 = arith.addf %15, %17 : vector<256x128xf32>
      %cst_17 = arith.constant 0.000000e+00 : f32
      %19 = vector.broadcast %cst_17 : f32 to vector<256x128xf32>
      %20 = arith.maximumf %18, %19 : vector<256x128xf32>
      %c0_18 = arith.constant 0 : index
      %c0_19 = arith.constant 0 : index
      %21 = vector.load %arg6[%c0_18, %c0_19] : memref<256x128xbf16, #tpu.memory_space<vmem>>, vector<256x128xbf16>
      %22 = arith.extf %21 : vector<256x128xbf16> to vector<256x128xf32>
      %23 = arith.mulf %20, %22 : vector<256x128xf32>
      %24 = arith.truncf %23 : vector<256x128xf32> to vector<256x128xbf16>
      %c0_20 = arith.constant 0 : index
      %c0_21 = arith.constant 0 : index
      %25 = vector.load %arg7[%c0_20, %c0_21] : memref<256x128xbf16, #tpu.memory_space<vmem>>, vector<256x128xbf16>
      tpu.vector_store %arg7[%c0_20, %c0_21], %24 {strides = array<i32>} : memref<256x128xbf16, #tpu.memory_space<vmem>>, vector<256x128xbf16>,
    } else {
    }
    return
  }
  func.func @transform_0(%arg0: i32, %arg1: i32) -> (i32, i32) {
    %c0_i32 = arith.constant 0 : i32
    return %arg0, %arg1 : i32, i32
  }
  func.func @transform_1(%arg0: i32, %arg1: i32) -> (i32, i32) {
    %c0_i32 = arith.constant 0 : i32
    %c0_i32_0 = arith.constant 0 : i32
    return %arg1, %c0_i32 : i32, i32
  }
  func.func @transform_2(%arg0: i32, %arg1: i32) -> (i32, i32) {
    %c0_i32 = arith.constant 0 : i32
    %c0_i32_0 = arith.constant 0 : i32
    %c0_i32_1 = arith.constant 0 : i32
    return %c0_i32, %c0_i32_0 : i32, i32
  }
  func.func @transform_3(%arg0: i32, %arg1: i32) -> (i32, i32) {
    %c0_i32 = arith.constant 0 : i32
    %c0_i32_0 = arith.constant 0 : i32
    %c0_i32_1 = arith.constant 0 : i32
    return %c0_i32, %c0_i32_0 : i32, i32
  }
  func.func @transform_4(%arg0: i32, %arg1: i32) -> (i32, i32) {
    %c0_i32 = arith.constant 0 : i32
    %c0_i32_0 = arith.constant 0 : i32
    return %arg0, %c0_i32 : i32, i32
  }
  func.func @transform_5(%arg0: i32, %arg1: i32) -> (i32, i32) {
    %c0_i32 = arith.constant 0 : i32
    %c0_i32_0 = arith.constant 0 : i32
    return %arg0, %c0_i32 : i32, i32
  }
}

</mosaic_0001>

<llo_original>
// kernel: tpu_custom_call.1
$region0: #{tpu_custom_call.1}
  #allocation0 [shape = 'u32[]', space=smem, size = 0x4, offset = 0x4, fixed_abs, tag = 'smem constant byte address 0x4 - core index']
  #allocation1 [shape = 'u32[144,128]{1,0:T(1,128)}', space=vmem, size = 0x12000, scoped, tag = 'internal scratch']
  #allocation2 [shape = 'f32[256,128]{1,0:T(8,128)}', space=vmem, size = 0x20000, scoped, tag = 'scratch operand']
  %s0 = inlined_call_operand.hbm [shape: bf16[256,256], index: 0, kind: input, shape index: {}]
  %s1 = inlined_call_operand.hbm [shape: bf16[256,128], index: 1, kind: input, shape index: {}]
  %s2 = inlined_call_operand.hbm [shape: bf16[128,128], index: 2, kind: input, shape index: {}]
  %s3 = inlined_call_operand.vmem [shape: f32[1,128], index: 3, kind: input, shape index: {}]
  %s4 = inlined_call_operand.hbm [shape: bf16[256,128], index: 4, kind: input, shape index: {}]
  %s5 = inlined_call_operand.hbm [shape: bf16[256,128], index: 5, kind: output, shape index: {}]
  %s6 = sld [smem:[#allocation0]]
  $region54: #{tpu_custom_call.1} parent=0
    _
  %s8 = ssub.s32 1, %s6
  %s9 = scalar_select 0, %s8, %s6
  $region1: #{tpu_custom_call.1} parent=0
    #allocation3 [shape = 'u8[131072]{0}', space=vmem, size = 0x20000, scoped, tag = 'input window, operand 0, single buffered']
    #allocation4 [shape = 's32[1]{0}', space=sflag, size = 0x4, scoped, tag = 'scoped memory for tpu_custom_call.1']
    #allocation5 [shape = 's32[1]{0}', space=sflag, size = 0x4, scoped, tag = 'scoped memory for tpu_custom_call.1']
    #allocation6 [shape = 'u8[65536]{0}', space=vmem, size = 0x10000, scoped, tag = 'input window, operand 1, single buffered']
    #allocation7 [shape = 's32[1]{0}', space=sflag, size = 0x4, scoped, tag = 'scoped memory for tpu_custom_call.1']
    #allocation8 [shape = 'u8[32768]{0}', space=vmem, size = 0x8000, scoped, tag = 'input window, operand 2, single buffered']
    #allocation9 [shape = 'u8[65536]{0}', space=vmem, size = 0x10000, scoped, tag = 'input window, operand 4, single buffered']
    #allocation10 [shape = 's32[1]{0}', space=sflag, size = 0x4, scoped, tag = 'scoped memory for tpu_custom_call.1']
    #allocation11 [shape = 'u8[65536]{0}', space=vmem, size = 0x10000, scoped, tag = 'output window, operand 0, single buffered']
    %10 = vsyncpa [#allocation4], 0
    %11 = vsyncpa [#allocation7], 0
    %12 = vsyncpa [#allocation10], 0
    %13 = vsyncpa [#allocation5], 0
    // Predicated region
    $region2: #{tpu_custom_call.1} parent=1 // pred_check
      _
    $region3: #{tpu_custom_call.1} parent=1 // pred_check_branch
      %15 = sbr.rel (0) target = $region5
    $region4: #{tpu_custom_call.1} parent=1 // pred_region
      %s17 = ssub.s32 4096, 4096
      %18 = vsyncadd [#allocation4], %s17
      %s19 = sshll.u32 [#allocation3], 4
      %s20 = int_to_ptr.vmem [resolvable:$true] %s19
      %25 = dma.hbm_to_vmem [thread:$0]  %s0, 4096, %s20, [#allocation4], 128, 128, 8
    $region5: #{tpu_custom_call.1} parent=1 // pred_fallthru
      _
    // Predicated region
    $region6: #{tpu_custom_call.1} parent=1 // pred_check
      _
    $region7: #{tpu_custom_call.1} parent=1 // pred_check_branch
      %27 = sbr.rel (0) target = $region9
    $region8: #{tpu_custom_call.1} parent=1 // pred_region
      %s29 = ssub.s32 2048, 2048
      %30 = vsyncadd [#allocation7], %s29
      %s31 = sshll.u32 [#allocation6], 4
      %s32 = int_to_ptr.vmem [resolvable:$true] %s31
      %37 = dma.hbm_to_vmem [thread:$0]  %s1, 2048, %s32, [#allocation7], 64, 64, 4
    $region9: #{tpu_custom_call.1} parent=1 // pred_fallthru
      _
    // Predicated region
    $region10: #{tpu_custom_call.1} parent=1 // pred_check
      _
    $region11: #{tpu_custom_call.1} parent=1 // pred_check_branch
      %39 = sbr.rel (0) target = $region13
    $region12: #{tpu_custom_call.1} parent=1 // pred_region
      %s41 = ssub.s32 1024, 1024
      %42 = vsyncadd [#allocation7], %s41
      %s43 = sshll.u32 [#allocation8], 4
      %s44 = int_to_ptr.vmem [resolvable:$true] %s43
      %49 = dma.hbm_to_vmem [thread:$0]  %s2, 1024, %s44, [#allocation7], 64, 64, 4
    $region13: #{tpu_custom_call.1} parent=1 // pred_fallthru
      _
    // Predicated region
    $region14: #{tpu_custom_call.1} parent=1 // pred_check
      _
    $region15: #{tpu_custom_call.1} parent=1 // pred_check_branch
      %51 = sbr.rel (0) target = $region17
    $region16: #{tpu_custom_call.1} parent=1 // pred_region
      _
    $region17: #{tpu_custom_call.1} parent=1 // pred_fallthru
      _
    // Predicated region
    $region18: #{tpu_custom_call.1} parent=1 // pred_check
      _
    $region19: #{tpu_custom_call.1} parent=1 // pred_check_branch
      %53 = sbr.rel (0) target = $region21
    $region20: #{tpu_custom_call.1} parent=1 // pred_region
      %s55 = ssub.s32 2048, 2048
      %56 = vsyncadd [#allocation10], %s55
      %s57 = sshll.u32 [#allocation9], 4
      %s58 = int_to_ptr.vmem [resolvable:$true] %s57
      %63 = dma.hbm_to_vmem [thread:$0]  %s4, 2048, %s58, [#allocation10], 64, 64, 4
    $region21: #{tpu_custom_call.1} parent=1 // pred_fallthru
      _
    // Predicated region
    $region22: #{tpu_custom_call.1} parent=1 // pred_check
      _
    $region23: #{tpu_custom_call.1} parent=1 // pred_check_branch
      %65 = sbr.rel (0) target = $region25
    $region24: #{tpu_custom_call.1} parent=1 // pred_region
      %66 = dma.done [#allocation4], 4096
    $region25: #{tpu_custom_call.1} parent=1 // pred_fallthru
      _
    // Predicated region
    $region26: #{tpu_custom_call.1} parent=1 // pred_check
      _
    $region27: #{tpu_custom_call.1} parent=1 // pred_check_branch
      %68 = sbr.rel (0) target = $region29
    $region28: #{tpu_custom_call.1} parent=1 // pred_region
      %69 = dma.done [#allocation7], 2048
    $region29: #{tpu_custom_call.1} parent=1 // pred_fallthru
      _
    // Predicated region
    $region30: #{tpu_custom_call.1} parent=1 // pred_check
      _
    $region31: #{tpu_custom_call.1} parent=1 // pred_check_branch
      %71 = sbr.rel (0) target = $region33
    $region32: #{tpu_custom_call.1} parent=1 // pred_region
      %72 = dma.done [#allocation7], 1024
    $region33: #{tpu_custom_call.1} parent=1 // pred_fallthru
      _
    // Predicated region
    $region34: #{tpu_custom_call.1} parent=1 // pred_check
      _
    $region35: #{tpu_custom_call.1} parent=1 // pred_check_branch
      %74 = sbr.rel (0) target = $region37
    $region36: #{tpu_custom_call.1} parent=1 // pred_region
      %75 = dma.done [#allocation10], 2048
    $region37: #{tpu_custom_call.1} parent=1 // pred_fallthru
      _
    %p77 = scmp.eq.s32.totalorder 0, 0
    // Predicated region
    $region38: #{tpu_custom_call.1} parent=1 // pred_check
      %p78 = pneg %p77
    $region39: #{tpu_custom_call.1} parent=1 // pred_check_branch
      %80 = sbr.rel (%p78) target = $region41
    $region40: #{tpu_custom_call.1} parent=1 // pred_region
      %81 = vst [vmem:[#allocation2] sm:$0xff] 0.0
      %82 = vst [vmem:[#allocation2 + $0x8] sm:$0xff] 0.0
      %83 = vst [vmem:[#allocation2 + $0x10] sm:$0xff] 0.0
      %84 = vst [vmem:[#allocation2 + $0x18] sm:$0xff] 0.0
      %85 = vst [vmem:[#allocation2 + $0x20] sm:$0xff] 0.0
      %86 = vst [vmem:[#allocation2 + $0x28] sm:$0xff] 0.0
      %87 = vst [vmem:[#allocation2 + $0x30] sm:$0xff] 0.0
      %88 = vst [vmem:[#allocation2 + $0x38] sm:$0xff] 0.0
      %89 = vst [vmem:[#allocation2 + $0x40] sm:$0xff] 0.0
      %90 = vst [vmem:[#allocation2 + $0x48] sm:$0xff] 0.0
      %91 = vst [vmem:[#allocation2 + $0x50] sm:$0xff] 0.0
      %92 = vst [vmem:[#allocation2 + $0x58] sm:$0xff] 0.0
      %93 = vst [vmem:[#allocation2 + $0x60] sm:$0xff] 0.0
      %94 = vst [vmem:[#allocation2 + $0x68] sm:$0xff] 0.0
      %95 = vst [vmem:[#allocation2 + $0x70] sm:$0xff] 0.0
      %96 = vst [vmem:[#allocation2 + $0x78] sm:$0xff] 0.0
      %97 = vst [vmem:[#allocation2 + $0x80] sm:$0xff] 0.0
      %98 = vst [vmem:[#allocation2 + $0x88] sm:$0xff] 0.0
      %99 = vst [vmem:[#allocation2 + $0x90] sm:$0xff] 0.0
      %100 = vst [vmem:[#allocation2 + $0x98] sm:$0xff] 0.0
      %101 = vst [vmem:[#allocation2 + $0xa0] sm:$0xff] 0.0
      %102 = vst [vmem:[#allocation2 + $0xa8] sm:$0xff] 0.0
      %103 = vst [vmem:[#allocation2 + $0xb0] sm:$0xff] 0.0
      %104 = vst [vmem:[#allocation2 + $0xb8] sm:$0xff] 0.0
      %105 = vst [vmem:[#allocation2 + $0xc0] sm:$0xff] 0.0
      %106 = vst [vmem:[#allocation2 + $0xc8] sm:$0xff] 0.0
      %107 = vst [vmem:[#allocation2 + $0xd0] sm:$0xff] 0.0
      %108 = vst [vmem:[#allocation2 + $0xd8] sm:$0xff] 0.0
      %109 = vst [vmem:[#allocation2 + $0xe0] sm:$0xff] 0.0
      %110 = vst [vmem:[#allocation2 + $0xe8] sm:$0xff] 0.0
      %111 = vst [vmem:[#allocation2 + $0xf0] sm:$0xff] 0.0
      %112 = vst [vmem:[#allocation2 + $0xf8] sm:$0xff] 0.0
    $region41: #{tpu_custom_call.1} parent=1 // pred_fallthru
      _
    %v113 = vld [vmem:[#allocation2] sm:$0xff]
    %v114 = vld [vmem:[#allocation2 + $0x8] sm:$0xff]
    %v115 = vld [vmem:[#allocation2 + $0x10] sm:$0xff]
    %v116 = vld [vmem:[#allocation2 + $0x18] sm:$0xff]
    %v117 = vld [vmem:[#allocation2 + $0x20] sm:$0xff]
    %v118 = vld [vmem:[#allocation2 + $0x28] sm:$0xff]
    %v119 = vld [vmem:[#allocation2 + $0x30] sm:$0xff]
    %v120 = vld [vmem:[#allocation2 + $0x38] sm:$0xff]
    %v121 = vld [vmem:[#allocation2 + $0x40] sm:$0xff]
    %v122 = vld [vmem:[#allocation2 + $0x48] sm:$0xff]
    %v123 = vld [vmem:[#allocation2 + $0x50] sm:$0xff]
    %v124 = vld [vmem:[#allocation2 + $0x58] sm:$0xff]
    %v125 = vld [vmem:[#allocation2 + $0x60] sm:$0xff]
    %v126 = vld [vmem:[#allocation2 + $0x68] sm:$0xff]
    %v127 = vld [vmem:[#allocation2 + $0x70] sm:$0xff]
    %v128 = vld [vmem:[#allocation2 + $0x78] sm:$0xff]
    %v129 = vld [vmem:[#allocation2 + $0x80] sm:$0xff]
    %v130 = vld [vmem:[#allocation2 + $0x88] sm:$0xff]
    %v131 = vld [vmem:[#allocation2 + $0x90] sm:$0xff]
    %v132 = vld [vmem:[#allocation2 + $0x98] sm:$0xff]
    %v133 = vld [vmem:[#allocation2 + $0xa0] sm:$0xff]
    %v134 = vld [vmem:[#allocation2 + $0xa8] sm:$0xff]
    %v135 = vld [vmem:[#allocation2 + $0xb0] sm:$0xff]
    %v136 = vld [vmem:[#allocation2 + $0xb8] sm:$0xff]
    %v137 = vld [vmem:[#allocation2 + $0xc0] sm:$0xff]
    %v138 = vld [vmem:[#allocation2 + $0xc8] sm:$0xff]
    %v139 = vld [vmem:[#allocation2 + $0xd0] sm:$0xff]
    %v140 = vld [vmem:[#allocation2 + $0xd8] sm:$0xff]
    %v141 = vld [vmem:[#allocation2 + $0xe0] sm:$0xff]
    %v142 = vld [vmem:[#allocation2 + $0xe8] sm:$0xff]
    %v143 = vld [vmem:[#allocation2 + $0xf0] sm:$0xff]
    %v144 = vld [vmem:[#allocation2 + $0xf8] sm:$0xff]
    %v145 = vld [vmem:[#allocation3] sm:$0xff]
    %v146 = vld [vmem:[#allocation3 + $0x8] sm:$0xff]
    %v147 = vld [vmem:[#allocation3 + $0x10] sm:$0xff]
    %v148 = vld [vmem:[#allocation3 + $0x18] sm:$0xff]
    %v149 = vld [vmem:[#allocation3 + $0x20] sm:$0xff]
    %v150 = vld [vmem:[#allocation3 + $0x28] sm:$0xff]
    %v151 = vld [vmem:[#allocation3 + $0x30] sm:$0xff]
    %v152 = vld [vmem:[#allocation3 + $0x38] sm:$0xff]
    %v153 = vld [vmem:[#allocation3 + $0x40] sm:$0xff]
    %v154 = vld [vmem:[#allocation3 + $0x48] sm:$0xff]
    %v155 = vld [vmem:[#allocation3 + $0x50] sm:$0xff]
    %v156 = vld [vmem:[#allocation3 + $0x58] sm:$0xff]
    %v157 = vld [vmem:[#allocation3 + $0x60] sm:$0xff]
    %v158 = vld [vmem:[#allocation3 + $0x68] sm:$0xff]
    %v159 = vld [vmem:[#allocation3 + $0x70] sm:$0xff]
    %v160 = vld [vmem:[#allocation3 + $0x78] sm:$0xff]
    %v161 = vld [vmem:[#allocation3 + $0x80] sm:$0xff]
    %v162 = vld [vmem:[#allocation3 + $0x88] sm:$0xff]
    %v163 = vld [vmem:[#allocation3 + $0x90] sm:$0xff]
    %v164 = vld [vmem:[#allocation3 + $0x98] sm:$0xff]
    %v165 = vld [vmem:[#allocation3 + $0xa0] sm:$0xff]
    %v166 = vld [vmem:[#allocation3 + $0xa8] sm:$0xff]
    %v167 = vld [vmem:[#allocation3 + $0xb0] sm:$0xff]
    %v168 = vld [vmem:[#allocation3 + $0xb8] sm:$0xff]
    %v169 = vld [vmem:[#allocation3 + $0xc0] sm:$0xff]
    %v170 = vld [vmem:[#allocation3 + $0xc8] sm:$0xff]
    %v171 = vld [vmem:[#allocation3 + $0xd0] sm:$0xff]
    %v172 = vld [vmem:[#allocation3 + $0xd8] sm:$0xff]
    %v173 = vld [vmem:[#allocation3 + $0xe0] sm:$0xff]
    %v174 = vld [vmem:[#allocation3 + $0xe8] sm:$0xff]
    %v175 = vld [vmem:[#allocation3 + $0xf0] sm:$0xff]
    %v176 = vld [vmem:[#allocation3 + $0xf8] sm:$0xff]
    %v177 = vld [vmem:[#allocation6] sm:$0xf]
    %v178 = vld [vmem:[#allocation6 + $0x4] sm:$0xf]
    %v179 = vld [vmem:[#allocation6 + $0x8] sm:$0xf]
    %v180 = vld [vmem:[#allocation6 + $0xc] sm:$0xf]
    %v181 = vld [vmem:[#allocation6 + $0x10] sm:$0xf]
    %v182 = vld [vmem:[#allocation6 + $0x14] sm:$0xf]
    %v183 = vld [vmem:[#allocation6 + $0x18] sm:$0xf]
    %v184 = vld [vmem:[#allocation6 + $0x1c] sm:$0xf]
    %v185 = vld [vmem:[#allocation6 + $0x20] sm:$0xf]
    %v186 = vld [vmem:[#allocation6 + $0x24] sm:$0xf]
    %v187 = vld [vmem:[#allocation6 + $0x28] sm:$0xf]
    %v188 = vld [vmem:[#allocation6 + $0x2c] sm:$0xf]
    %v189 = vld [vmem:[#allocation6 + $0x30] sm:$0xf]
    %v190 = vld [vmem:[#allocation6 + $0x34] sm:$0xf]
    %v191 = vld [vmem:[#allocation6 + $0x38] sm:$0xf]
    %v192 = vld [vmem:[#allocation6 + $0x3c] sm:$0xf]
    %v193 = vld [vmem:[#allocation6 + $0x40] sm:$0xf]
    %v194 = vld [vmem:[#allocation6 + $0x44] sm:$0xf]
    %v195 = vld [vmem:[#allocation6 + $0x48] sm:$0xf]
    %v196 = vld [vmem:[#allocation6 + $0x4c] sm:$0xf]
    %v197 = vld [vmem:[#allocation6 + $0x50] sm:$0xf]
    %v198 = vld [vmem:[#allocation6 + $0x54] sm:$0xf]
    %v199 = vld [vmem:[#allocation6 + $0x58] sm:$0xf]
    %v200 = vld [vmem:[#allocation6 + $0x5c] sm:$0xf]
    %v201 = vld [vmem:[#allocation6 + $0x60] sm:$0xf]
    %v202 = vld [vmem:[#allocation6 + $0x64] sm:$0xf]
    %v203 = vld [vmem:[#allocation6 + $0x68] sm:$0xf]
    %v204 = vld [vmem:[#allocation6 + $0x6c] sm:$0xf]
    %v205 = vld [vmem:[#allocation6 + $0x70] sm:$0xf]
    %v206 = vld [vmem:[#allocation6 + $0x74] sm:$0xf]
    %v207 = vld [vmem:[#allocation6 + $0x78] sm:$0xf]
    %v208 = vld [vmem:[#allocation6 + $0x7c] sm:$0xf]
    %v241 = vunpack.c.l.b16 %v145
    %v242 = vunpack.c.h.b16 %v145
    %v243 = vunpack.c.l.b16 %v146
    %v244 = vunpack.c.h.b16 %v146
    %v245 = vunpack.c.l.b16 %v147
    %v246 = vunpack.c.h.b16 %v147
    %v247 = vunpack.c.l.b16 %v148
    %v248 = vunpack.c.h.b16 %v148
    %v249 = vunpack.c.l.b16 %v149
    %v250 = vunpack.c.h.b16 %v149
    %v251 = vunpack.c.l.b16 %v150
    %v252 = vunpack.c.h.b16 %v150
    %v253 = vunpack.c.l.b16 %v151
    %v254 = vunpack.c.h.b16 %v151
    %v255 = vunpack.c.l.b16 %v152
    %v256 = vunpack.c.h.b16 %v152
    %v257 = vunpack.c.l.b16 %v153
    %v258 = vunpack.c.h.b16 %v153
    %v259 = vunpack.c.l.b16 %v154
    %v260 = vunpack.c.h.b16 %v154
    %v261 = vunpack.c.l.b16 %v155
    %v262 = vunpack.c.h.b16 %v155
    %v263 = vunpack.c.l.b16 %v156
    %v264 = vunpack.c.h.b16 %v156
    %v265 = vunpack.c.l.b16 %v157
    %v266 = vunpack.c.h.b16 %v157
    %v267 = vunpack.c.l.b16 %v158
    %v268 = vunpack.c.h.b16 %v158
    %v269 = vunpack.c.l.b16 %v159
    %v270 = vunpack.c.h.b16 %v159
    %v271 = vunpack.c.l.b16 %v160
    %v272 = vunpack.c.h.b16 %v160
    %v273 = vunpack.c.l.b16 %v161
    %v274 = vunpack.c.h.b16 %v161
    %v275 = vunpack.c.l.b16 %v162
    %v276 = vunpack.c.h.b16 %v162
    %v277 = vunpack.c.l.b16 %v163
    %v278 = vunpack.c.h.b16 %v163
    %v279 = vunpack.c.l.b16 %v164
    %v280 = vunpack.c.h.b16 %v164
    %v281 = vunpack.c.l.b16 %v165
    %v282 = vunpack.c.h.b16 %v165
    %v283 = vunpack.c.l.b16 %v166
    %v284 = vunpack.c.h.b16 %v166
    %v285 = vunpack.c.l.b16 %v167
    %v286 = vunpack.c.h.b16 %v167
    %v287 = vunpack.c.l.b16 %v168
    %v288 = vunpack.c.h.b16 %v168
    %v289 = vunpack.c.l.b16 %v169
    %v290 = vunpack.c.h.b16 %v169
    %v291 = vunpack.c.l.b16 %v170
    %v292 = vunpack.c.h.b16 %v170
    %v293 = vunpack.c.l.b16 %v171
    %v294 = vunpack.c.h.b16 %v171
    %v295 = vunpack.c.l.b16 %v172
    %v296 = vunpack.c.h.b16 %v172
    %v297 = vunpack.c.l.b16 %v173
    %v298 = vunpack.c.h.b16 %v173
    %v299 = vunpack.c.l.b16 %v174
    %v300 = vunpack.c.h.b16 %v174
    %v301 = vunpack.c.l.b16 %v175
    %v302 = vunpack.c.h.b16 %v175
    %v303 = vunpack.c.l.b16 %v176
    %v304 = vunpack.c.h.b16 %v176
    %v305 = vpack.c.b16 %v243, %v241
    %v306 = vpack.c.b16 %v244, %v242
    %v307 = vpack.c.b16 %v247, %v245
    %v308 = vpack.c.b16 %v248, %v246
    %v309 = vpack.c.b16 %v251, %v249
    %v310 = vpack.c.b16 %v252, %v250
    %v311 = vpack.c.b16 %v255, %v253
    %v312 = vpack.c.b16 %v256, %v254
    %v313 = vpack.c.b16 %v259, %v257
    %v314 = vpack.c.b16 %v260, %v258
    %v315 = vpack.c.b16 %v263, %v261
    %v316 = vpack.c.b16 %v264, %v262
    %v317 = vpack.c.b16 %v267, %v265
    %v318 = vpack.c.b16 %v268, %v266
    %v319 = vpack.c.b16 %v271, %v269
    %v320 = vpack.c.b16 %v272, %v270
    %v321 = vpack.c.b16 %v275, %v273
    %v322 = vpack.c.b16 %v276, %v274
    %v323 = vpack.c.b16 %v279, %v277
    %v324 = vpack.c.b16 %v280, %v278
    %v325 = vpack.c.b16 %v283, %v281
    %v326 = vpack.c.b16 %v284, %v282
    %v327 = vpack.c.b16 %v287, %v285
    %v328 = vpack.c.b16 %v288, %v286
    %v329 = vpack.c.b16 %v291, %v289
    %v330 = vpack.c.b16 %v292, %v290
    %v331 = vpack.c.b16 %v295, %v293
    %v332 = vpack.c.b16 %v296, %v294
    %v333 = vpack.c.b16 %v299, %v297
    %v334 = vpack.c.b16 %v300, %v298
    %v335 = vpack.c.b16 %v303, %v301
    %v336 = vpack.c.b16 %v304, %v302
    %v401 = vunpack.c.l.b16 %v177
    %v402 = vunpack.c.l.b16 %v178
    %v403 = vunpack.c.l.b16 %v179
    %v404 = vunpack.c.l.b16 %v180
    %v405 = vunpack.c.l.b16 %v181
    %v406 = vunpack.c.l.b16 %v182
    %v407 = vunpack.c.l.b16 %v183
    %v408 = vunpack.c.l.b16 %v184
    %v409 = vunpack.c.l.b16 %v185
    %v410 = vunpack.c.l.b16 %v186
    %v411 = vunpack.c.l.b16 %v187
    %v412 = vunpack.c.l.b16 %v188
    %v413 = vunpack.c.l.b16 %v189
    %v414 = vunpack.c.l.b16 %v190
    %v415 = vunpack.c.l.b16 %v191
    %v416 = vunpack.c.l.b16 %v192
    %v417 = vunpack.c.l.b16 %v193
    %v418 = vunpack.c.l.b16 %v194
    %v419 = vunpack.c.l.b16 %v195
    %v420 = vunpack.c.l.b16 %v196
    %v421 = vunpack.c.l.b16 %v197
    %v422 = vunpack.c.l.b16 %v198
    %v423 = vunpack.c.l.b16 %v199
    %v424 = vunpack.c.l.b16 %v200
    %v425 = vunpack.c.l.b16 %v201
    %v426 = vunpack.c.l.b16 %v202
    %v427 = vunpack.c.l.b16 %v203
    %v428 = vunpack.c.l.b16 %v204
    %v429 = vunpack.c.l.b16 %v205
    %v430 = vunpack.c.l.b16 %v206
    %v431 = vunpack.c.l.b16 %v207
    %v432 = vunpack.c.l.b16 %v208
    %v433 = vpack.c.b16 %v402, %v401
    %v434 = vpack.c.b16 %v404, %v403
    %v435 = vpack.c.b16 %v406, %v405
    %v436 = vpack.c.b16 %v408, %v407
    %v437 = vpack.c.b16 %v410, %v409
    %v438 = vpack.c.b16 %v412, %v411
    %v439 = vpack.c.b16 %v414, %v413
    %v440 = vpack.c.b16 %v416, %v415
    %v441 = vpack.c.b16 %v418, %v417
    %v442 = vpack.c.b16 %v420, %v419
    %v443 = vpack.c.b16 %v422, %v421
    %v444 = vpack.c.b16 %v424, %v423
    %v445 = vpack.c.b16 %v426, %v425
    %v446 = vpack.c.b16 %v428, %v427
    %v447 = vpack.c.b16 %v430, %v429
    %v448 = vpack.c.b16 %v432, %v431
    %465 = vmatprep.subr.bf16.mxu0 0
    %466 = vmatpush1.bf16.msra.mxu0 %v433
    %467 = vmatprep.subr.bf16.mxu0 0
    %468 = vmatpush1.bf16.msra.mxu0 %v434
    %469 = vmatprep.subr.bf16.mxu0 0
    %470 = vmatpush1.bf16.msra.mxu0 %v435
    %471 = vmatprep.subr.bf16.mxu0 0
    %472 = vmatpush1.bf16.msra.mxu0 %v436
    %473 = vmatprep.subr.bf16.mxu0 0
    %474 = vmatpush1.bf16.msra.mxu0 %v437
    %475 = vmatprep.subr.bf16.mxu0 0
    %476 = vmatpush1.bf16.msra.mxu0 %v438
    %477 = vmatprep.subr.bf16.mxu0 0
    %478 = vmatpush1.bf16.msra.mxu0 %v439
    %479 = vmatprep.subr.bf16.mxu0 0
    %480 = vmatpush1.bf16.msra.mxu0 %v440
    %481 = vmatprep.subr.bf16.mxu0 0
    %482 = vmatpush1.bf16.msra.mxu0 %v441
    %483 = vmatprep.subr.bf16.mxu0 0
    %484 = vmatpush1.bf16.msra.mxu0 %v442
    %485 = vmatprep.subr.bf16.mxu0 0
    %486 = vmatpush1.bf16.msra.mxu0 %v443
    %487 = vmatprep.subr.bf16.mxu0 0
    %488 = vmatpush1.bf16.msra.mxu0 %v444
    %489 = vmatprep.subr.bf16.mxu0 0
    %490 = vmatpush1.bf16.msra.mxu0 %v445
    %491 = vmatprep.subr.bf16.mxu0 0
    %492 = vmatpush1.bf16.msra.mxu0 %v446
    %493 = vmatprep.subr.bf16.mxu0 0
    %494 = vmatpush1.bf16.msra.mxu0 %v447
    %495 = vmatprep.subr.bf16.mxu0 0
    %496 = vmatpush1.bf16.msra.mxu0 %v448
    %497 = vmatprep.mubr.bf16.mxu0 %v306
    %498 = vmatmul.mubr.bf16.gmra.mrb[0].mxu0 %v305
    %v499 = vpop.f32.mrb[0].mxu0
    %v500 = vadd.f32 0.0, %v499
    %v501 = vpop.f32.mrb[0].mxu0
    %v502 = vpop.f32.mrb[0].mxu0
    %v503 = vadd.f32 0.0, %v502
    %v504 = vpop.f32.mrb[0].mxu0
    %505 = vmatprep.mubr.bf16.mxu0 %v308
    %506 = vmatmul.mubr.bf16.gmra.mrb[0].mxu0 %v307
    %v507 = vpop.f32.mrb[0].mxu0
    %v508 = vadd.f32 0.0, %v507
    %v509 = vpop.f32.mrb[0].mxu0
    %v510 = vpop.f32.mrb[0].mxu0
    %v511 = vadd.f32 0.0, %v510
    %v512 = vpop.f32.mrb[0].mxu0
    %513 = vmatprep.mubr.bf16.mxu0 %v310
    %514 = vmatmul.mubr.bf16.gmra.mrb[0].mxu0 %v309
    %v515 = vpop.f32.mrb[0].mxu0
    %v516 = vadd.f32 0.0, %v515
    %v517 = vpop.f32.mrb[0].mxu0
    %v518 = vpop.f32.mrb[0].mxu0
    %v519 = vadd.f32 0.0, %v518
    %v520 = vpop.f32.mrb[0].mxu0
    %521 = vmatprep.mubr.bf16.mxu0 %v312
    %522 = vmatmul.mubr.bf16.gmra.mrb[0].mxu0 %v311
    %v523 = vpop.f32.mrb[0].mxu0
    %v524 = vadd.f32 0.0, %v523
    %v525 = vpop.f32.mrb[0].mxu0
    %v526 = vpop.f32.mrb[0].mxu0
    %v527 = vadd.f32 0.0, %v526
    %v528 = vpop.f32.mrb[0].mxu0
    %529 = vmatprep.mubr.bf16.mxu0 %v314
    %530 = vmatmul.mubr.bf16.gmra.mrb[0].mxu0 %v313
    %v531 = vpop.f32.mrb[0].mxu0
    %v532 = vadd.f32 0.0, %v531
    %v533 = vpop.f32.mrb[0].mxu0
    %v534 = vpop.f32.mrb[0].mxu0
    %v535 = vadd.f32 0.0, %v534
    %v536 = vpop.f32.mrb[0].mxu0
    %537 = vmatprep.mubr.bf16.mxu0 %v316
    %538 = vmatmul.mubr.bf16.gmra.mrb[0].mxu0 %v315
    %v539 = vpop.f32.mrb[0].mxu0
    %v540 = vadd.f32 0.0, %v539
    %v541 = vpop.f32.mrb[0].mxu0
    %v542 = vpop.f32.mrb[0].mxu0
    %v543 = vadd.f32 0.0, %v542
    %v544 = vpop.f32.mrb[0].mxu0
    %545 = vmatprep.mubr.bf16.mxu0 %v318
    %546 = vmatmul.mubr.bf16.gmra.mrb[0].mxu0 %v317
    %v547 = vpop.f32.mrb[0].mxu0
    %v548 = vadd.f32 0.0, %v547
    %v549 = vpop.f32.mrb[0].mxu0
    %v550 = vpop.f32.mrb[0].mxu0
    %v551 = vadd.f32 0.0, %v550
    %v552 = vpop.f32.mrb[0].mxu0
    %553 = vmatprep.mubr.bf16.mxu0 %v320
    %554 = vmatmul.mubr.bf16.gmra.mrb[0].mxu0 %v319
    %v555 = vpop.f32.mrb[0].mxu0
    %v556 = vadd.f32 0.0, %v555
    %v557 = vpop.f32.mrb[0].mxu0
    %v558 = vpop.f32.mrb[0].mxu0
    %v559 = vadd.f32 0.0, %v558
    %v560 = vpop.f32.mrb[0].mxu0
    %561 = vmatprep.mubr.bf16.mxu0 %v322
    %562 = vmatmul.mubr.bf16.gmra.mrb[0].mxu0 %v321
    %v563 = vpop.f32.mrb[0].mxu0
    %v564 = vadd.f32 0.0, %v563
    %v565 = vpop.f32.mrb[0].mxu0
    %v566 = vpop.f32.mrb[0].mxu0
    %v567 = vadd.f32 0.0, %v566
    %v568 = vpop.f32.mrb[0].mxu0
    %569 = vmatprep.mubr.bf16.mxu0 %v324
    %570 = vmatmul.mubr.bf16.gmra.mrb[0].mxu0 %v323
    %v571 = vpop.f32.mrb[0].mxu0
    %v572 = vadd.f32 0.0, %v571
    %v573 = vpop.f32.mrb[0].mxu0
    %v574 = vpop.f32.mrb[0].mxu0
    %v575 = vadd.f32 0.0, %v574
    %v576 = vpop.f32.mrb[0].mxu0
    %577 = vmatprep.mubr.bf16.mxu0 %v326
    %578 = vmatmul.mubr.bf16.gmra.mrb[0].mxu0 %v325
    %v579 = vpop.f32.mrb[0].mxu0
    %v580 = vadd.f32 0.0, %v579
    %v581 = vpop.f32.mrb[0].mxu0
    %v582 = vpop.f32.mrb[0].mxu0
    %v583 = vadd.f32 0.0, %v582
    %v584 = vpop.f32.mrb[0].mxu0
    %585 = vmatprep.mubr.bf16.mxu0 %v328
    %586 = vmatmul.mubr.bf16.gmra.mrb[0].mxu0 %v327
    %v587 = vpop.f32.mrb[0].mxu0
    %v588 = vadd.f32 0.0, %v587
    %v589 = vpop.f32.mrb[0].mxu0
    %v590 = vpop.f32.mrb[0].mxu0
    %v591 = vadd.f32 0.0, %v590
    %v592 = vpop.f32.mrb[0].mxu0
    %593 = vmatprep.mubr.bf16.mxu0 %v330
    %594 = vmatmul.mubr.bf16.gmra.mrb[0].mxu0 %v329
    %v595 = vpop.f32.mrb[0].mxu0
    %v596 = vadd.f32 0.0, %v595
    %v597 = vpop.f32.mrb[0].mxu0
    %v598 = vpop.f32.mrb[0].mxu0
    %v599 = vadd.f32 0.0, %v598
    %v600 = vpop.f32.mrb[0].mxu0
    %601 = vmatprep.mubr.bf16.mxu0 %v332
    %602 = vmatmul.mubr.bf16.gmra.mrb[0].mxu0 %v331
    %v603 = vpop.f32.mrb[0].mxu0
    %v604 = vadd.f32 0.0, %v603
    %v605 = vpop.f32.mrb[0].mxu0
    %v606 = vpop.f32.mrb[0].mxu0
    %v607 = vadd.f32 0.0, %v606
    %v608 = vpop.f32.mrb[0].mxu0
    %609 = vmatprep.mubr.bf16.mxu0 %v334
    %610 = vmatmul.mubr.bf16.gmra.mrb[0].mxu0 %v333
    %v611 = vpop.f32.mrb[0].mxu0
    %v612 = vadd.f32 0.0, %v611
    %v613 = vpop.f32.mrb[0].mxu0
    %v614 = vpop.f32.mrb[0].mxu0
    %v615 = vadd.f32 0.0, %v614
    %v616 = vpop.f32.mrb[0].mxu0
    %617 = vmatprep.mubr.bf16.mxu0 %v336
    %618 = vmatmul.mubr.bf16.gmra.mrb[0].mxu0 %v335
    %v619 = vpop.f32.mrb[0].mxu0
    %v620 = vadd.f32 0.0, %v619
    %v621 = vpop.f32.mrb[0].mxu0
    %v622 = vpop.f32.mrb[0].mxu0
    %v623 = vadd.f32 0.0, %v622
    %v624 = vpop.f32.mrb[0].mxu0
    %625 = vdwg.mxu0
    %v626 = vadd.f32 %v113, %v500
    %v627 = vadd.f32 %v114, %v503
    %v628 = vadd.f32 %v115, %v508
    %v629 = vadd.f32 %v116, %v511
    %v630 = vadd.f32 %v117, %v516
    %v631 = vadd.f32 %v118, %v519
    %v632 = vadd.f32 %v119, %v524
    %v633 = vadd.f32 %v120, %v527
    %v634 = vadd.f32 %v121, %v532
    %v635 = vadd.f32 %v122, %v535
    %v636 = vadd.f32 %v123, %v540
    %v637 = vadd.f32 %v124, %v543
    %v638 = vadd.f32 %v125, %v548
    %v639 = vadd.f32 %v126, %v551
    %v640 = vadd.f32 %v127, %v556
    %v641 = vadd.f32 %v128, %v559
    %v642 = vadd.f32 %v129, %v564
    %v643 = vadd.f32 %v130, %v567
    %v644 = vadd.f32 %v131, %v572
    %v645 = vadd.f32 %v132, %v575
    %v646 = vadd.f32 %v133, %v580
    %v647 = vadd.f32 %v134, %v583
    %v648 = vadd.f32 %v135, %v588
    %v649 = vadd.f32 %v136, %v591
    %v650 = vadd.f32 %v137, %v596
    %v651 = vadd.f32 %v138, %v599
    %v652 = vadd.f32 %v139, %v604
    %v653 = vadd.f32 %v140, %v607
    %v654 = vadd.f32 %v141, %v612
    %v655 = vadd.f32 %v142, %v615
    %v656 = vadd.f32 %v143, %v620
    %v657 = vadd.f32 %v144, %v623
    %658 = vst [vmem:[#allocation2] sm:$0xff] %v626
    %659 = vst [vmem:[#allocation2 + $0x8] sm:$0xff] %v627
    %660 = vst [vmem:[#allocation2 + $0x10] sm:$0xff] %v628
    %661 = vst [vmem:[#allocation2 + $0x18] sm:$0xff] %v629
    %662 = vst [vmem:[#allocation2 + $0x20] sm:$0xff] %v630
    %663 = vst [vmem:[#allocation2 + $0x28] sm:$0xff] %v631
    %664 = vst [vmem:[#allocation2 + $0x30] sm:$0xff] %v632
    %665 = vst [vmem:[#allocation2 + $0x38] sm:$0xff] %v633
    %666 = vst [vmem:[#allocation2 + $0x40] sm:$0xff] %v634
    %667 = vst [vmem:[#allocation2 + $0x48] sm:$0xff] %v635
    %668 = vst [vmem:[#allocation2 + $0x50] sm:$0xff] %v636
    %669 = vst [vmem:[#allocation2 + $0x58] sm:$0xff] %v637
    %670 = vst [vmem:[#allocation2 + $0x60] sm:$0xff] %v638
    %671 = vst [vmem:[#allocation2 + $0x68] sm:$0xff] %v639
    %672 = vst [vmem:[#allocation2 + $0x70] sm:$0xff] %v640
    %673 = vst [vmem:[#allocation2 + $0x78] sm:$0xff] %v641
    %674 = vst [vmem:[#allocation2 + $0x80] sm:$0xff] %v642
    %675 = vst [vmem:[#allocation2 + $0x88] sm:$0xff] %v643
    %676 = vst [vmem:[#allocation2 + $0x90] sm:$0xff] %v644
    %677 = vst [vmem:[#allocation2 + $0x98] sm:$0xff] %v645
    %678 = vst [vmem:[#allocation2 + $0xa0] sm:$0xff] %v646
    %679 = vst [vmem:[#allocation2 + $0xa8] sm:$0xff] %v647
    %680 = vst [vmem:[#allocation2 + $0xb0] sm:$0xff] %v648
    %681 = vst [vmem:[#allocation2 + $0xb8] sm:$0xff] %v649
    %682 = vst [vmem:[#allocation2 + $0xc0] sm:$0xff] %v650
    %683 = vst [vmem:[#allocation2 + $0xc8] sm:$0xff] %v651
    %684 = vst [vmem:[#allocation2 + $0xd0] sm:$0xff] %v652
    %685 = vst [vmem:[#allocation2 + $0xd8] sm:$0xff] %v653
    %686 = vst [vmem:[#allocation2 + $0xe0] sm:$0xff] %v654
    %687 = vst [vmem:[#allocation2 + $0xe8] sm:$0xff] %v655
    %688 = vst [vmem:[#allocation2 + $0xf0] sm:$0xff] %v656
    %689 = vst [vmem:[#allocation2 + $0xf8] sm:$0xff] %v657
    // Predicated region
    $region42: #{tpu_custom_call.1} parent=1 // pred_check
      %p690 = pneg %p77
    $region43: #{tpu_custom_call.1} parent=1 // pred_check_branch
      %692 = sbr.rel (%p690) target = $region45
    $region44: #{tpu_custom_call.1} parent=1 // pred_region
      %v693 = vld [vmem:[#allocation2] sm:$0xff]
      %v694 = vld [vmem:[#allocation2 + $0x8] sm:$0xff]
      %v695 = vld [vmem:[#allocation2 + $0x10] sm:$0xff]
      %v696 = vld [vmem:[#allocation2 + $0x18] sm:$0xff]
      %v697 = vld [vmem:[#allocation2 + $0x20] sm:$0xff]
      %v698 = vld [vmem:[#allocation2 + $0x28] sm:$0xff]
      %v699 = vld [vmem:[#allocation2 + $0x30] sm:$0xff]
      %v700 = vld [vmem:[#allocation2 + $0x38] sm:$0xff]
      %v701 = vld [vmem:[#allocation2 + $0x40] sm:$0xff]
      %v702 = vld [vmem:[#allocation2 + $0x48] sm:$0xff]
      %v703 = vld [vmem:[#allocation2 + $0x50] sm:$0xff]
      %v704 = vld [vmem:[#allocation2 + $0x58] sm:$0xff]
      %v705 = vld [vmem:[#allocation2 + $0x60] sm:$0xff]
      %v706 = vld [vmem:[#allocation2 + $0x68] sm:$0xff]
      %v707 = vld [vmem:[#allocation2 + $0x70] sm:$0xff]
      %v708 = vld [vmem:[#allocation2 + $0x78] sm:$0xff]
      %v709 = vld [vmem:[#allocation2 + $0x80] sm:$0xff]
      %v710 = vld [vmem:[#allocation2 + $0x88] sm:$0xff]
      %v711 = vld [vmem:[#allocation2 + $0x90] sm:$0xff]
      %v712 = vld [vmem:[#allocation2 + $0x98] sm:$0xff]
      %v713 = vld [vmem:[#allocation2 + $0xa0] sm:$0xff]
      %v714 = vld [vmem:[#allocation2 + $0xa8] sm:$0xff]
      %v715 = vld [vmem:[#allocation2 + $0xb0] sm:$0xff]
      %v716 = vld [vmem:[#allocation2 + $0xb8] sm:$0xff]
      %v717 = vld [vmem:[#allocation2 + $0xc0] sm:$0xff]
      %v718 = vld [vmem:[#allocation2 + $0xc8] sm:$0xff]
      %v719 = vld [vmem:[#allocation2 + $0xd0] sm:$0xff]
      %v720 = vld [vmem:[#allocation2 + $0xd8] sm:$0xff]
      %v721 = vld [vmem:[#allocation2 + $0xe0] sm:$0xff]
      %v722 = vld [vmem:[#allocation2 + $0xe8] sm:$0xff]
      %v723 = vld [vmem:[#allocation2 + $0xf0] sm:$0xff]
      %v724 = vld [vmem:[#allocation2 + $0xf8] sm:$0xff]
      %v725 = vpack.c.bf16 %v694, %v693
      %v726 = vpack.c.bf16 %v696, %v695
      %v727 = vpack.c.bf16 %v698, %v697
      %v728 = vpack.c.bf16 %v700, %v699
      %v729 = vpack.c.bf16 %v702, %v701
      %v730 = vpack.c.bf16 %v704, %v703
      %v731 = vpack.c.bf16 %v706, %v705
      %v732 = vpack.c.bf16 %v708, %v707
      %v733 = vpack.c.bf16 %v710, %v709
      %v734 = vpack.c.bf16 %v712, %v711
      %v735 = vpack.c.bf16 %v714, %v713
      %v736 = vpack.c.bf16 %v716, %v715
      %v737 = vpack.c.bf16 %v718, %v717
      %v738 = vpack.c.bf16 %v720, %v719
      %v739 = vpack.c.bf16 %v722, %v721
      %v740 = vpack.c.bf16 %v724, %v723
      %v741 = vld [vmem:[#allocation8] sm:$0xf]
      %v742 = vld [vmem:[#allocation8 + $0x4] sm:$0xf]
      %v743 = vld [vmem:[#allocation8 + $0x8] sm:$0xf]
      %v744 = vld [vmem:[#allocation8 + $0xc] sm:$0xf]
      %v745 = vld [vmem:[#allocation8 + $0x10] sm:$0xf]
      %v746 = vld [vmem:[#allocation8 + $0x14] sm:$0xf]
      %v747 = vld [vmem:[#allocation8 + $0x18] sm:$0xf]
      %v748 = vld [vmem:[#allocation8 + $0x1c] sm:$0xf]
      %v749 = vld [vmem:[#allocation8 + $0x20] sm:$0xf]
      %v750 = vld [vmem:[#allocation8 + $0x24] sm:$0xf]
      %v751 = vld [vmem:[#allocation8 + $0x28] sm:$0xf]
      %v752 = vld [vmem:[#allocation8 + $0x2c] sm:$0xf]
      %v753 = vld [vmem:[#allocation8 + $0x30] sm:$0xf]
      %v754 = vld [vmem:[#allocation8 + $0x34] sm:$0xf]
      %v755 = vld [vmem:[#allocation8 + $0x38] sm:$0xf]
      %v756 = vld [vmem:[#allocation8 + $0x3c] sm:$0xf]
      %v757 = vld [vmem:[%s3] sm:$0x1]
      %v759 = vlaneseq
      %v760 = vshrl.u32 %v759, 7
      %v761 = vsub.s32 0, %v760
      %v762 = vrot.slane %v757, %v761
      %v780 = vunpack.c.l.b16 %v741
      %v781 = vunpack.c.l.b16 %v742
      %v782 = vunpack.c.l.b16 %v743
      %v783 = vunpack.c.l.b16 %v744
      %v784 = vunpack.c.l.b16 %v745
      %v785 = vunpack.c.l.b16 %v746
      %v786 = vunpack.c.l.b16 %v747
      %v787 = vunpack.c.l.b16 %v748
      %v788 = vunpack.c.l.b16 %v749
      %v789 = vunpack.c.l.b16 %v750
      %v790 = vunpack.c.l.b16 %v751
      %v791 = vunpack.c.l.b16 %v752
      %v792 = vunpack.c.l.b16 %v753
      %v793 = vunpack.c.l.b16 %v754
      %v794 = vunpack.c.l.b16 %v755
      %v795 = vunpack.c.l.b16 %v756
      %v796 = vpack.c.b16 %v781, %v780
      %v797 = vpack.c.b16 %v783, %v782
      %v798 = vpack.c.b16 %v785, %v784
      %v799 = vpack.c.b16 %v787, %v786
      %v800 = vpack.c.b16 %v789, %v788
      %v801 = vpack.c.b16 %v791, %v790
      %v802 = vpack.c.b16 %v793, %v792
      %v803 = vpack.c.b16 %v795, %v794
      %812 = vmatprep.subr.bf16.mxu0 0
      %813 = vmatpush1.bf16.msra.mxu0 %v796
      %814 = vmatprep.subr.bf16.mxu0 0
      %815 = vmatpush1.bf16.msra.mxu0 %v797
      %816 = vmatprep.subr.bf16.mxu0 0
      %817 = vmatpush1.bf16.msra.mxu0 %v798
      %818 = vmatprep.subr.bf16.mxu0 0
      %819 = vmatpush1.bf16.msra.mxu0 %v799
      %820 = vmatprep.subr.bf16.mxu0 0
      %821 = vmatpush1.bf16.msra.mxu0 %v800
      %822 = vmatprep.subr.bf16.mxu0 0
      %823 = vmatpush1.bf16.msra.mxu0 %v801
      %824 = vmatprep.subr.bf16.mxu0 0
      %825 = vmatpush1.bf16.msra.mxu0 %v802
      %826 = vmatprep.subr.bf16.mxu0 0
      %827 = vmatpush1.bf16.msra.mxu0 %v803
      %828 = vmatprep.subr.bf16.mxu0 0
      %829 = vmatpush1.bf16.msra.mxu0 0
      %830 = vmatprep.subr.bf16.mxu0 0
      %831 = vmatpush1.bf16.msra.mxu0 0
      %832 = vmatprep.subr.bf16.mxu0 0
      %833 = vmatpush1.bf16.msra.mxu0 0
      %834 = vmatprep.subr.bf16.mxu0 0
      %835 = vmatpush1.bf16.msra.mxu0 0
      %836 = vmatprep.subr.bf16.mxu0 0
      %837 = vmatpush1.bf16.msra.mxu0 0
      %838 = vmatprep.subr.bf16.mxu0 0
      %839 = vmatpush1.bf16.msra.mxu0 0
      %840 = vmatprep.subr.bf16.mxu0 0
      %841 = vmatpush1.bf16.msra.mxu0 0
      %842 = vmatprep.subr.bf16.mxu0 0
      %843 = vmatpush1.bf16.msra.mxu0 0
      %844 = vmatprep.mubr.bf16.mxu0 0
      %845 = vmatmul.mubr.bf16.gmra.mrb[0].mxu0 %v725
      %v846 = vpop.f32.mrb[0].mxu0
      %v847 = vadd.f32 %v762, %v846
      %v848 = vpop.f32.mrb[0].mxu0
      %v849 = vpop.f32.mrb[0].mxu0
      %v850 = vadd.f32 %v762, %v849
      %v851 = vpop.f32.mrb[0].mxu0
      %852 = vmatprep.mubr.bf16.mxu0 0
      %853 = vmatmul.mubr.bf16.gmra.mrb[0].mxu0 %v726
      %v854 = vpop.f32.mrb[0].mxu0
      %v855 = vadd.f32 %v762, %v854
      %v856 = vpop.f32.mrb[0].mxu0
      %v857 = vpop.f32.mrb[0].mxu0
      %v858 = vadd.f32 %v762, %v857
      %v859 = vpop.f32.mrb[0].mxu0
      %860 = vmatprep.mubr.bf16.mxu0 0
      %861 = vmatmul.mubr.bf16.gmra.mrb[0].mxu0 %v727
      %v862 = vpop.f32.mrb[0].mxu0
      %v863 = vadd.f32 %v762, %v862
      %v864 = vpop.f32.mrb[0].mxu0
      %v865 = vpop.f32.mrb[0].mxu0
      %v866 = vadd.f32 %v762, %v865
      %v867 = vpop.f32.mrb[0].mxu0
      %868 = vmatprep.mubr.bf16.mxu0 0
      %869 = vmatmul.mubr.bf16.gmra.mrb[0].mxu0 %v728
      %v870 = vpop.f32.mrb[0].mxu0
      %v871 = vadd.f32 %v762, %v870
      %v872 = vpop.f32.mrb[0].mxu0
      %v873 = vpop.f32.mrb[0].mxu0
      %v874 = vadd.f32 %v762, %v873
      %v875 = vpop.f32.mrb[0].mxu0
      %876 = vmatprep.mubr.bf16.mxu0 0
      %877 = vmatmul.mubr.bf16.gmra.mrb[0].mxu0 %v729
      %v878 = vpop.f32.mrb[0].mxu0
      %v879 = vadd.f32 %v762, %v878
      %v880 = vpop.f32.mrb[0].mxu0
      %v881 = vpop.f32.mrb[0].mxu0
      %v882 = vadd.f32 %v762, %v881
      %v883 = vpop.f32.mrb[0].mxu0
      %884 = vmatprep.mubr.bf16.mxu0 0
      %885 = vmatmul.mubr.bf16.gmra.mrb[0].mxu0 %v730
      %v886 = vpop.f32.mrb[0].mxu0
      %v887 = vadd.f32 %v762, %v886
      %v888 = vpop.f32.mrb[0].mxu0
      %v889 = vpop.f32.mrb[0].mxu0
      %v890 = vadd.f32 %v762, %v889
      %v891 = vpop.f32.mrb[0].mxu0
      %892 = vmatprep.mubr.bf16.mxu0 0
      %893 = vmatmul.mubr.bf16.gmra.mrb[0].mxu0 %v731
      %v894 = vpop.f32.mrb[0].mxu0
      %v895 = vadd.f32 %v762, %v894
      %v896 = vpop.f32.mrb[0].mxu0
      %v897 = vpop.f32.mrb[0].mxu0
      %v898 = vadd.f32 %v762, %v897
      %v899 = vpop.f32.mrb[0].mxu0
      %900 = vmatprep.mubr.bf16.mxu0 0
      %901 = vmatmul.mubr.bf16.gmra.mrb[0].mxu0 %v732
      %v902 = vpop.f32.mrb[0].mxu0
      %v903 = vadd.f32 %v762, %v902
      %v904 = vpop.f32.mrb[0].mxu0
      %v905 = vpop.f32.mrb[0].mxu0
      %v906 = vadd.f32 %v762, %v905
      %v907 = vpop.f32.mrb[0].mxu0
      %908 = vmatprep.mubr.bf16.mxu0 0
      %909 = vmatmul.mubr.bf16.gmra.mrb[0].mxu0 %v733
      %v910 = vpop.f32.mrb[0].mxu0
      %v911 = vadd.f32 %v762, %v910
      %v912 = vpop.f32.mrb[0].mxu0
      %v913 = vpop.f32.mrb[0].mxu0
      %v914 = vadd.f32 %v762, %v913
      %v915 = vpop.f32.mrb[0].mxu0
      %916 = vmatprep.mubr.bf16.mxu0 0
      %917 = vmatmul.mubr.bf16.gmra.mrb[0].mxu0 %v734
      %v918 = vpop.f32.mrb[0].mxu0
      %v919 = vadd.f32 %v762, %v918
      %v920 = vpop.f32.mrb[0].mxu0
      %v921 = vpop.f32.mrb[0].mxu0
      %v922 = vadd.f32 %v762, %v921
      %v923 = vpop.f32.mrb[0].mxu0
      %924 = vmatprep.mubr.bf16.mxu0 0
      %925 = vmatmul.mubr.bf16.gmra.mrb[0].mxu0 %v735
      %v926 = vpop.f32.mrb[0].mxu0
      %v927 = vadd.f32 %v762, %v926
      %v928 = vpop.f32.mrb[0].mxu0
      %v929 = vpop.f32.mrb[0].mxu0
      %v930 = vadd.f32 %v762, %v929
      %v931 = vpop.f32.mrb[0].mxu0
      %932 = vmatprep.mubr.bf16.mxu0 0
      %933 = vmatmul.mubr.bf16.gmra.mrb[0].mxu0 %v736
      %v934 = vpop.f32.mrb[0].mxu0
      %v935 = vadd.f32 %v762, %v934
      %v936 = vpop.f32.mrb[0].mxu0
      %v937 = vpop.f32.mrb[0].mxu0
      %v938 = vadd.f32 %v762, %v937
      %v939 = vpop.f32.mrb[0].mxu0
      %940 = vmatprep.mubr.bf16.mxu0 0
      %941 = vmatmul.mubr.bf16.gmra.mrb[0].mxu0 %v737
      %v942 = vpop.f32.mrb[0].mxu0
      %v943 = vadd.f32 %v762, %v942
      %v944 = vpop.f32.mrb[0].mxu0
      %v945 = vpop.f32.mrb[0].mxu0
      %v946 = vadd.f32 %v762, %v945
      %v947 = vpop.f32.mrb[0].mxu0
      %948 = vmatprep.mubr.bf16.mxu0 0
      %949 = vmatmul.mubr.bf16.gmra.mrb[0].mxu0 %v738
      %v950 = vpop.f32.mrb[0].mxu0
      %v951 = vadd.f32 %v762, %v950
      %v952 = vpop.f32.mrb[0].mxu0
      %v953 = vpop.f32.mrb[0].mxu0
      %v954 = vadd.f32 %v762, %v953
      %v955 = vpop.f32.mrb[0].mxu0
      %956 = vmatprep.mubr.bf16.mxu0 0
      %957 = vmatmul.mubr.bf16.gmra.mrb[0].mxu0 %v739
      %v958 = vpop.f32.mrb[0].mxu0
      %v959 = vadd.f32 %v762, %v958
      %v960 = vpop.f32.mrb[0].mxu0
      %v961 = vpop.f32.mrb[0].mxu0
      %v962 = vadd.f32 %v762, %v961
      %v963 = vpop.f32.mrb[0].mxu0
      %964 = vmatprep.mubr.bf16.mxu0 0
      %965 = vmatmul.mubr.bf16.gmra.mrb[0].mxu0 %v740
      %v966 = vpop.f32.mrb[0].mxu0
      %v967 = vadd.f32 %v762, %v966
      %v968 = vpop.f32.mrb[0].mxu0
      %v969 = vpop.f32.mrb[0].mxu0
      %v970 = vadd.f32 %v762, %v969
      %v971 = vpop.f32.mrb[0].mxu0
      %972 = vdwg.mxu0
      %v973 = vmax.f32 %v847, 0.0
      %v974 = vmax.f32 %v850, 0.0
      %v975 = vmax.f32 %v855, 0.0
      %v976 = vmax.f32 %v858, 0.0
      %v977 = vmax.f32 %v863, 0.0
      %v978 = vmax.f32 %v866, 0.0
      %v979 = vmax.f32 %v871, 0.0
      %v980 = vmax.f32 %v874, 0.0
      %v981 = vmax.f32 %v879, 0.0
      %v982 = vmax.f32 %v882, 0.0
      %v983 = vmax.f32 %v887, 0.0
      %v984 = vmax.f32 %v890, 0.0
      %v985 = vmax.f32 %v895, 0.0
      %v986 = vmax.f32 %v898, 0.0
      %v987 = vmax.f32 %v903, 0.0
      %v988 = vmax.f32 %v906, 0.0
      %v989 = vmax.f32 %v911, 0.0
      %v990 = vmax.f32 %v914, 0.0
      %v991 = vmax.f32 %v919, 0.0
      %v992 = vmax.f32 %v922, 0.0
      %v993 = vmax.f32 %v927, 0.0
      %v994 = vmax.f32 %v930, 0.0
      %v995 = vmax.f32 %v935, 0.0
      %v996 = vmax.f32 %v938, 0.0
      %v997 = vmax.f32 %v943, 0.0
      %v998 = vmax.f32 %v946, 0.0
      %v999 = vmax.f32 %v951, 0.0
      %v1000 = vmax.f32 %v954, 0.0
      %v1001 = vmax.f32 %v959, 0.0
      %v1002 = vmax.f32 %v962, 0.0
      %v1003 = vmax.f32 %v967, 0.0
      %v1004 = vmax.f32 %v970, 0.0
      %v1005 = vld [vmem:[#allocation9] sm:$0xf]
      %v1006 = vld [vmem:[#allocation9 + $0x4] sm:$0xf]
      %v1007 = vld [vmem:[#allocation9 + $0x8] sm:$0xf]
      %v1008 = vld [vmem:[#allocation9 + $0xc] sm:$0xf]
      %v1009 = vld [vmem:[#allocation9 + $0x10] sm:$0xf]
      %v1010 = vld [vmem:[#allocation9 + $0x14] sm:$0xf]
      %v1011 = vld [vmem:[#allocation9 + $0x18] sm:$0xf]
      %v1012 = vld [vmem:[#allocation9 + $0x1c] sm:$0xf]
      %v1013 = vld [vmem:[#allocation9 + $0x20] sm:$0xf]
      %v1014 = vld [vmem:[#allocation9 + $0x24] sm:$0xf]
      %v1015 = vld [vmem:[#allocation9 + $0x28] sm:$0xf]
      %v1016 = vld [vmem:[#allocation9 + $0x2c] sm:$0xf]
      %v1017 = vld [vmem:[#allocation9 + $0x30] sm:$0xf]
      %v1018 = vld [vmem:[#allocation9 + $0x34] sm:$0xf]
      %v1019 = vld [vmem:[#allocation9 + $0x38] sm:$0xf]
      %v1020 = vld [vmem:[#allocation9 + $0x3c] sm:$0xf]
      %v1021 = vld [vmem:[#allocation9 + $0x40] sm:$0xf]
      %v1022 = vld [vmem:[#allocation9 + $0x44] sm:$0xf]
      %v1023 = vld [vmem:[#allocation9 + $0x48] sm:$0xf]
      %v1024 = vld [vmem:[#allocation9 + $0x4c] sm:$0xf]
      %v1025 = vld [vmem:[#allocation9 + $0x50] sm:$0xf]
      %v1026 = vld [vmem:[#allocation9 + $0x54] sm:$0xf]
      %v1027 = vld [vmem:[#allocation9 + $0x58] sm:$0xf]
      %v1028 = vld [vmem:[#allocation9 + $0x5c] sm:$0xf]
      %v1029 = vld [vmem:[#allocation9 + $0x60] sm:$0xf]
      %v1030 = vld [vmem:[#allocation9 + $0x64] sm:$0xf]
      %v1031 = vld [vmem:[#allocation9 + $0x68] sm:$0xf]
      %v1032 = vld [vmem:[#allocation9 + $0x6c] sm:$0xf]
      %v1033 = vld [vmem:[#allocation9 + $0x70] sm:$0xf]
      %v1034 = vld [vmem:[#allocation9 + $0x74] sm:$0xf]
      %v1035 = vld [vmem:[#allocation9 + $0x78] sm:$0xf]
      %v1036 = vld [vmem:[#allocation9 + $0x7c] sm:$0xf]
      %v1037 = vunpack.c.l.bf16 %v1005
      %v1038 = vunpack.c.l.bf16 %v1006
      %v1039 = vunpack.c.l.bf16 %v1007
      %v1040 = vunpack.c.l.bf16 %v1008
      %v1041 = vunpack.c.l.bf16 %v1009
      %v1042 = vunpack.c.l.bf16 %v1010
      %v1043 = vunpack.c.l.bf16 %v1011
      %v1044 = vunpack.c.l.bf16 %v1012
      %v1045 = vunpack.c.l.bf16 %v1013
      %v1046 = vunpack.c.l.bf16 %v1014
      %v1047 = vunpack.c.l.bf16 %v1015
      %v1048 = vunpack.c.l.bf16 %v1016
      %v1049 = vunpack.c.l.bf16 %v1017
      %v1050 = vunpack.c.l.bf16 %v1018
      %v1051 = vunpack.c.l.bf16 %v1019
      %v1052 = vunpack.c.l.bf16 %v1020
      %v1053 = vunpack.c.l.bf16 %v1021
      %v1054 = vunpack.c.l.bf16 %v1022
      %v1055 = vunpack.c.l.bf16 %v1023
      %v1056 = vunpack.c.l.bf16 %v1024
      %v1057 = vunpack.c.l.bf16 %v1025
      %v1058 = vunpack.c.l.bf16 %v1026
      %v1059 = vunpack.c.l.bf16 %v1027
      %v1060 = vunpack.c.l.bf16 %v1028
      %v1061 = vunpack.c.l.bf16 %v1029
      %v1062 = vunpack.c.l.bf16 %v1030
      %v1063 = vunpack.c.l.bf16 %v1031
      %v1064 = vunpack.c.l.bf16 %v1032
      %v1065 = vunpack.c.l.bf16 %v1033
      %v1066 = vunpack.c.l.bf16 %v1034
      %v1067 = vunpack.c.l.bf16 %v1035
      %v1068 = vunpack.c.l.bf16 %v1036
      %v1069 = vmul.f32 %v973, %v1037
      %v1070 = vmul.f32 %v974, %v1038
      %v1071 = vmul.f32 %v975, %v1039
      %v1072 = vmul.f32 %v976, %v1040
      %v1073 = vmul.f32 %v977, %v1041
      %v1074 = vmul.f32 %v978, %v1042
      %v1075 = vmul.f32 %v979, %v1043
      %v1076 = vmul.f32 %v980, %v1044
      %v1077 = vmul.f32 %v981, %v1045
      %v1078 = vmul.f32 %v982, %v1046
      %v1079 = vmul.f32 %v983, %v1047
      %v1080 = vmul.f32 %v984, %v1048
      %v1081 = vmul.f32 %v985, %v1049
      %v1082 = vmul.f32 %v986, %v1050
      %v1083 = vmul.f32 %v987, %v1051
      %v1084 = vmul.f32 %v988, %v1052
      %v1085 = vmul.f32 %v989, %v1053
      %v1086 = vmul.f32 %v990, %v1054
      %v1087 = vmul.f32 %v991, %v1055
      %v1088 = vmul.f32 %v992, %v1056
      %v1089 = vmul.f32 %v993, %v1057
      %v1090 = vmul.f32 %v994, %v1058
      %v1091 = vmul.f32 %v995, %v1059
      %v1092 = vmul.f32 %v996, %v1060
      %v1093 = vmul.f32 %v997, %v1061
      %v1094 = vmul.f32 %v998, %v1062
      %v1095 = vmul.f32 %v999, %v1063
      %v1096 = vmul.f32 %v1000, %v1064
      %v1097 = vmul.f32 %v1001, %v1065
      %v1098 = vmul.f32 %v1002, %v1066
      %v1099 = vmul.f32 %v1003, %v1067
      %v1100 = vmul.f32 %v1004, %v1068
      %v1101 = vpack.c.bf16 %v1070, %v1069
      %v1102 = vpack.c.bf16 %v1072, %v1071
      %v1103 = vpack.c.bf16 %v1074, %v1073
      %v1104 = vpack.c.bf16 %v1076, %v1075
      %v1105 = vpack.c.bf16 %v1078, %v1077
      %v1106 = vpack.c.bf16 %v1080, %v1079
      %v1107 = vpack.c.bf16 %v1082, %v1081
      %v1108 = vpack.c.bf16 %v1084, %v1083
      %v1109 = vpack.c.bf16 %v1086, %v1085
      %v1110 = vpack.c.bf16 %v1088, %v1087
      %v1111 = vpack.c.bf16 %v1090, %v1089
      %v1112 = vpack.c.bf16 %v1092, %v1091
      %v1113 = vpack.c.bf16 %v1094, %v1093
      %v1114 = vpack.c.bf16 %v1096, %v1095
      %v1115 = vpack.c.bf16 %v1098, %v1097
      %v1116 = vpack.c.bf16 %v1100, %v1099
      %v1133 = vunpack.c.l.b16 %v1101
      %v1134 = vunpack.c.h.b16 %v1101
      %v1135 = vunpack.c.l.b16 %v1102
      %v1136 = vunpack.c.h.b16 %v1102
      %v1137 = vunpack.c.l.b16 %v1103
      %v1138 = vunpack.c.h.b16 %v1103
      %v1139 = vunpack.c.l.b16 %v1104
      %v1140 = vunpack.c.h.b16 %v1104
      %v1141 = vunpack.c.l.b16 %v1105
      %v1142 = vunpack.c.h.b16 %v1105
      %v1143 = vunpack.c.l.b16 %v1106
      %v1144 = vunpack.c.h.b16 %v1106
      %v1145 = vunpack.c.l.b16 %v1107
      %v1146 = vunpack.c.h.b16 %v1107
      %v1147 = vunpack.c.l.b16 %v1108
      %v1148 = vunpack.c.h.b16 %v1108
      %v1149 = vunpack.c.l.b16 %v1109
      %v1150 = vunpack.c.h.b16 %v1109
      %v1151 = vunpack.c.l.b16 %v1110
      %v1152 = vunpack.c.h.b16 %v1110
      %v1153 = vunpack.c.l.b16 %v1111
      %v1154 = vunpack.c.h.b16 %v1111
      %v1155 = vunpack.c.l.b16 %v1112
      %v1156 = vunpack.c.h.b16 %v1112
      %v1157 = vunpack.c.l.b16 %v1113
      %v1158 = vunpack.c.h.b16 %v1113
      %v1159 = vunpack.c.l.b16 %v1114
      %v1160 = vunpack.c.h.b16 %v1114
      %v1161 = vunpack.c.l.b16 %v1115
      %v1162 = vunpack.c.h.b16 %v1115
      %v1163 = vunpack.c.l.b16 %v1116
      %v1164 = vunpack.c.h.b16 %v1116
      %v1165 = vpack.c.b16 %v1133, %v1133
      %v1166 = vpack.c.b16 %v1134, %v1134
      %v1167 = vpack.c.b16 %v1135, %v1135
      %v1168 = vpack.c.b16 %v1136, %v1136
      %v1169 = vpack.c.b16 %v1137, %v1137
      %v1170 = vpack.c.b16 %v1138, %v1138
      %v1171 = vpack.c.b16 %v1139, %v1139
      %v1172 = vpack.c.b16 %v1140, %v1140
      %v1173 = vpack.c.b16 %v1141, %v1141
      %v1174 = vpack.c.b16 %v1142, %v1142
      %v1175 = vpack.c.b16 %v1143, %v1143
      %v1176 = vpack.c.b16 %v1144, %v1144
      %v1177 = vpack.c.b16 %v1145, %v1145
      %v1178 = vpack.c.b16 %v1146, %v1146
      %v1179 = vpack.c.b16 %v1147, %v1147
      %v1180 = vpack.c.b16 %v1148, %v1148
      %v1181 = vpack.c.b16 %v1149, %v1149
      %v1182 = vpack.c.b16 %v1150, %v1150
      %v1183 = vpack.c.b16 %v1151, %v1151
      %v1184 = vpack.c.b16 %v1152, %v1152
      %v1185 = vpack.c.b16 %v1153, %v1153
      %v1186 = vpack.c.b16 %v1154, %v1154
      %v1187 = vpack.c.b16 %v1155, %v1155
      %v1188 = vpack.c.b16 %v1156, %v1156
      %v1189 = vpack.c.b16 %v1157, %v1157
      %v1190 = vpack.c.b16 %v1158, %v1158
      %v1191 = vpack.c.b16 %v1159, %v1159
      %v1192 = vpack.c.b16 %v1160, %v1160
      %v1193 = vpack.c.b16 %v1161, %v1161
      %v1194 = vpack.c.b16 %v1162, %v1162
      %v1195 = vpack.c.b16 %v1163, %v1163
      %v1196 = vpack.c.b16 %v1164, %v1164
      %1229 = vst [vmem:[#allocation11] sm:$0xf] %v1165
      %1230 = vst [vmem:[#allocation11 + $0x4] sm:$0xf] %v1166
      %1231 = vst [vmem:[#allocation11 + $0x8] sm:$0xf] %v1167
      %1232 = vst [vmem:[#allocation11 + $0xc] sm:$0xf] %v1168
      %1233 = vst [vmem:[#allocation11 + $0x10] sm:$0xf] %v1169
      %1234 = vst [vmem:[#allocation11 + $0x14] sm:$0xf] %v1170
      %1235 = vst [vmem:[#allocation11 + $0x18] sm:$0xf] %v1171
      %1236 = vst [vmem:[#allocation11 + $0x1c] sm:$0xf] %v1172
      %1237 = vst [vmem:[#allocation11 + $0x20] sm:$0xf] %v1173
      %1238 = vst [vmem:[#allocation11 + $0x24] sm:$0xf] %v1174
      %1239 = vst [vmem:[#allocation11 + $0x28] sm:$0xf] %v1175
      %1240 = vst [vmem:[#allocation11 + $0x2c] sm:$0xf] %v1176
      %1241 = vst [vmem:[#allocation11 + $0x30] sm:$0xf] %v1177
      %1242 = vst [vmem:[#allocation11 + $0x34] sm:$0xf] %v1178
      %1243 = vst [vmem:[#allocation11 + $0x38] sm:$0xf] %v1179
      %1244 = vst [vmem:[#allocation11 + $0x3c] sm:$0xf] %v1180
      %1245 = vst [vmem:[#allocation11 + $0x40] sm:$0xf] %v1181
      %1246 = vst [vmem:[#allocation11 + $0x44] sm:$0xf] %v1182
      %1247 = vst [vmem:[#allocation11 + $0x48] sm:$0xf] %v1183
      %1248 = vst [vmem:[#allocation11 + $0x4c] sm:$0xf] %v1184
      %1249 = vst [vmem:[#allocation11 + $0x50] sm:$0xf] %v1185
      %1250 = vst [vmem:[#allocation11 + $0x54] sm:$0xf] %v1186
      %1251 = vst [vmem:[#allocation11 + $0x58] sm:$0xf] %v1187
      %1252 = vst [vmem:[#allocation11 + $0x5c] sm:$0xf] %v1188
      %1253 = vst [vmem:[#allocation11 + $0x60] sm:$0xf] %v1189
      %1254 = vst [vmem:[#allocation11 + $0x64] sm:$0xf] %v1190
      %1255 = vst [vmem:[#allocation11 + $0x68] sm:$0xf] %v1191
      %1256 = vst [vmem:[#allocation11 + $0x6c] sm:$0xf] %v1192
      %1257 = vst [vmem:[#allocation11 + $0x70] sm:$0xf] %v1193
      %1258 = vst [vmem:[#allocation11 + $0x74] sm:$0xf] %v1194
      %1259 = vst [vmem:[#allocation11 + $0x78] sm:$0xf] %v1195
      %1260 = vst [vmem:[#allocation11 + $0x7c] sm:$0xf] %v1196
    $region45: #{tpu_custom_call.1} parent=1 // pred_fallthru
      _
    // Predicated region
    $region46: #{tpu_custom_call.1} parent=1 // pred_check
      _
    $region47: #{tpu_custom_call.1} parent=1 // pred_check_branch
      %1262 = sbr.rel (0) target = $region49
    $region48: #{tpu_custom_call.1} parent=1 // pred_region
      %s1264 = ssub.s32 2048, 2048
      %1265 = vsyncadd [#allocation5], %s1264
      %s1266 = sshll.u32 [#allocation11], 4
      %s1267 = int_to_ptr.vmem [resolvable:$true] %s1266
      %1272 = dma.vmem_to_hbm [thread:$0]  %s1267, 2048, %s5, [#allocation5], 64, 64, 4
    $region49: #{tpu_custom_call.1} parent=1 // pred_fallthru
      _
    // Predicated region
    $region50: #{tpu_custom_call.1} parent=1 // pred_check
      _
    $region51: #{tpu_custom_call.1} parent=1 // pred_check_branch
      %1274 = sbr.rel (0) target = $region53
    $region52: #{tpu_custom_call.1} parent=1 // pred_region
      %1275 = dma.done [#allocation5], 2048
    $region53: #{tpu_custom_call.1} parent=1 // pred_fallthru
      _
    %1276 = vsyncpa [#allocation4], 1
    %1277 = vsyncpa [#allocation7], 1
    %1278 = vsyncpa [#allocation10], 1
    %1279 = vsyncpa [#allocation5], 1

</llo_original>
